<compile_context>
chip_gen: v7x
topology: tpu7x:2x2x1
jax: 0.10.0
libtpu: 0.0.40
codegen_flags: <defaults>
</compile_context>

<pallas_src>
import jax
import jax.numpy as jnp
from jax import lax
from jax.experimental import pallas as pl
from jax.experimental.pallas import tpu as pltpu

SUBLANE = 8
LANE = 128


def _round_up(x, m):
    return ((x + m - 1) // m) * m


def _choose_tm(m, k, itemsize):
    """Pick the row-tile (lane axis of the output). Full-extent single block
    when it fits the budget; otherwise a 128-multiple tile with an even number
    of grid steps (so both v7x TensorCores stay busy)."""
    # ~4 MiB per x buffer (double-buffered input + (Ns, tm) output is tiny).
    cap = (4 * 1024 * 1024) // max(1, k * itemsize)
    cap = max(LANE, min(2048, (cap // LANE) * LANE))
    if m <= cap:
        return m  # single block; block dims equal full array dims
    steps = pl.cdiv(m, cap)
    if steps % 2 == 1:
        steps += 1  # even step count for v7x megacore balance
    return max(LANE, _round_up(pl.cdiv(m, steps), LANE))


def linear_kernel(x_ref, wt_ref, b_ref, o_ref):
    # x_ref: (tm, K)  wt_ref: (Ns, K)  b_ref: (Ns, 1)  o_ref: (Ns, tm)
    acc = lax.dot_general(
        wt_ref[...], x_ref[...],
        dimension_numbers=(((1,), (1,)), ((), ())),   # contract K; result (Ns, tm)
        preferred_element_type=jnp.float32,
    )
    o_ref[...] = (acc + b_ref[...]).astype(o_ref.dtype)


def node_regressor_forward(h, w, b):
    """h: (..., hidden_dim), w: (hidden_dim, output_dim), b: (output_dim,).
    Returns (h @ w + b) with the last dim squeezed iff output_dim == 1."""
    lead = h.shape[:-1]
    K = h.shape[-1]
    N = w.shape[1]

    x2d = h.reshape(-1, K)
    M = x2d.shape[0]
    itemsize = jnp.dtype(x2d.dtype).itemsize

    Ns = _round_up(N, SUBLANE)            # sublane-padded output_dim
    tm = _choose_tm(M, K, itemsize)
    steps = pl.cdiv(M, tm)

    w_t = jnp.pad(w.T, ((0, Ns - N), (0, 0)))      # (Ns, K), tiny
    b_p = jnp.pad(b, (0, Ns - N)).reshape(Ns, 1)   # (Ns, 1), tiny

    cost = pl.CostEstimate(
        flops=2 * M * K * Ns,
        transcendentals=0,
        bytes_accessed=(M * K + Ns * K + Ns + Ns * M) * itemsize,
    )

    out_t = pl.pallas_call(
        linear_kernel,
        out_shape=jax.ShapeDtypeStruct((Ns, M), x2d.dtype),
        grid_spec=pltpu.PrefetchScalarGridSpec(
            num_scalar_prefetch=0,
            grid=(steps,),
            in_specs=[
                pl.BlockSpec((tm, K), lambda i: (i, 0)),   # x row tile
                pl.BlockSpec((Ns, K), lambda i: (0, 0)),   # W^T (resident)
                pl.BlockSpec((Ns, 1), lambda i: (0, 0)),   # b   (resident)
            ],
            out_specs=pl.BlockSpec((Ns, tm), lambda i: (0, i)),
        ),
        compiler_params=pltpu.CompilerParams(
            dimension_semantics=("parallel",),
        ),
        cost_estimate=cost,
    )(x2d, w_t, b_p)

    out = out_t[:N, :]          # drop sublane padding: (N, M), contiguous slice
    if N == 1:                  # torch .squeeze(-1) drops only a size-1 dim
        return out[0].reshape(lead)
    return out.T.reshape(*lead, N)


if __name__ == "__main__":
    # Small shapes consistent with the module: node embeddings (batch, nodes, hidden)
    batch, nodes = 2, 8
    hidden_dim, output_dim = 32, 1

    key = jax.random.PRNGKey(0)
    kh, kw, kb = jax.random.split(key, 3)

    h = jax.random.normal(kh, (batch, nodes, hidden_dim), dtype=jnp.float32)
    # Parameters stored as (in, out) = torch_weight.T and (out,)
    w = jax.random.normal(kw, (hidden_dim, output_dim), dtype=jnp.float32) * 0.1
    b = jax.random.normal(kb, (output_dim,), dtype=jnp.float32) * 0.1

    y = node_regressor_forward(h, w, b)
    y = jax.block_until_ready(y)

    # Plain-JAX reference of NodeRegressor.forward
    y_ref = (h @ w + b)[..., 0]
    assert y.shape == (batch, nodes), y.shape
    assert jnp.allclose(y, y_ref, atol=1e-5, rtol=1e-5)

    print("KERNEL_OK")
</pallas_src>

<mosaic_0001>
module attributes {stable_mosaic.version = 11 : i64} {
  func.func @linear_kernel(%arg0: i32, %arg1: memref<16x32xf32, #tpu.memory_space<vmem>>, %arg2: memref<8x32xf32, #tpu.memory_space<vmem>>, %arg3: memref<8x1xf32, #tpu.memory_space<vmem>>, %arg4: memref<8x16xf32, #tpu.memory_space<vmem>>) attributes {dimension_semantics = [#tpu.dimension_semantics<parallel>], iteration_bounds = array<i64: 1>, scalar_prefetch = 0 : i64, scratch_operands = 0 : i64, tpu.core_type = #tpu.core_type<tc>, window_params = [{transform_indices = @transform_0, window_bounds = array<i64: 16, 32>}, {pipeline_mode = #tpu.pipeline_mode<synchronous>, transform_indices = @transform_1, window_bounds = array<i64: 8, 32>}, {pipeline_mode = #tpu.pipeline_mode<synchronous>, transform_indices = @transform_2, window_bounds = array<i64: 8, 1>}, {transform_indices = @transform_3, window_bounds = array<i64: 8, 16>}]} {
    %c0 = arith.constant 0 : index
    %c0_0 = arith.constant 0 : index
    %0 = vector.load %arg2[%c0, %c0_0] : memref<8x32xf32, #tpu.memory_space<vmem>>, vector<8x32xf32>
    %c0_1 = arith.constant 0 : index
    %c0_2 = arith.constant 0 : index
    %1 = vector.load %arg1[%c0_1, %c0_2] : memref<16x32xf32, #tpu.memory_space<vmem>>, vector<16x32xf32>
    %cst = arith.constant dense<0.000000e+00> : vector<8x16xf32>
    %2 = tpu.matmul %0, %1, %cst {dimension_numbers = #tpu.dot_dimension_numbers<[1], [1], [0], [0], [0, 0, 1, 0], [], []>} : vector<8x32xf32>, vector<16x32xf32>, vector<8x16xf32> -> vector<8x16xf32>
    %c0_3 = arith.constant 0 : index
    %c0_4 = arith.constant 0 : index
    %3 = vector.load %arg3[%c0_3, %c0_4] : memref<8x1xf32, #tpu.memory_space<vmem>>, vector<8x1xf32>
    %4 = vector.broadcast %3 : vector<8x1xf32> to vector<8x16xf32>
    %5 = arith.addf %2, %4 : vector<8x16xf32>
    %c0_5 = arith.constant 0 : index
    %c0_6 = arith.constant 0 : index
    %6 = vector.load %arg4[%c0_5, %c0_6] : memref<8x16xf32, #tpu.memory_space<vmem>>, vector<8x16xf32>
    tpu.vector_store %arg4[%c0_5, %c0_6], %5 {strides = array<i32>} : memref<8x16xf32, #tpu.memory_space<vmem>>, vector<8x16xf32>,
    return
  }
  func.func @transform_0(%arg0: i32) -> (i32, i32) {
    %c0_i32 = arith.constant 0 : i32
    %c0_i32_0 = arith.constant 0 : i32
    return %arg0, %c0_i32 : i32, i32
  }
  func.func @transform_1(%arg0: i32) -> (i32, i32) {
    %c0_i32 = arith.constant 0 : i32
    %c0_i32_0 = arith.constant 0 : i32
    %c0_i32_1 = arith.constant 0 : i32
    return %c0_i32, %c0_i32_0 : i32, i32
  }
  func.func @transform_2(%arg0: i32) -> (i32, i32) {
    %c0_i32 = arith.constant 0 : i32
    %c0_i32_0 = arith.constant 0 : i32
    %c0_i32_1 = arith.constant 0 : i32
    return %c0_i32, %c0_i32_0 : i32, i32
  }
  func.func @transform_3(%arg0: i32) -> (i32, i32) {
    %c0_i32 = arith.constant 0 : i32
    %c0_i32_0 = arith.constant 0 : i32
    return %c0_i32, %arg0 : i32, i32
  }
}

</mosaic_0001>

<llo_original>
// kernel: tpu_custom_call.1
$region0: #{tpu_custom_call.1}
  #allocation0 [shape = 'u32[]', space=smem, size = 0x4, offset = 0x4, fixed_abs, tag = 'smem constant byte address 0x4 - core index']
  #allocation1 [shape = 'u32[144,128]{1,0:T(1,128)}', space=vmem, size = 0x12000, scoped, tag = 'internal scratch']
  %s0 = inlined_call_operand.hbm [shape: f32[16,32], index: 0, kind: input, shape index: {}]
  %s1 = inlined_call_operand.vmem [shape: f32[8,32], index: 1, kind: input, shape index: {}]
  %s2 = inlined_call_operand.vmem [shape: f32[8,1], index: 2, kind: input, shape index: {}]
  %s3 = inlined_call_operand.hbm [shape: f32[8,16], index: 3, kind: output, shape index: {}]
  %s4 = sld [smem:[#allocation0]]
  $region26: #{tpu_custom_call.1} parent=0
    _
  %s6 = ssub.s32 1, %s4
  %s7 = scalar_select 0, %s6, %s4
  $region1: #{tpu_custom_call.1} parent=0
    #allocation2 [shape = 'u8[8192]{0}', space=vmem, size = 0x2000, scoped, tag = 'input window, operand 0, single buffered']
    #allocation3 [shape = 's32[1]{0}', space=sflag, size = 0x4, scoped, tag = 'scoped memory for tpu_custom_call.1']
    #allocation4 [shape = 's32[1]{0}', space=sflag, size = 0x4, scoped, tag = 'scoped memory for tpu_custom_call.1']
    #allocation5 [shape = 'u8[4096]{0}', space=vmem, size = 0x1000, scoped, tag = 'output window, operand 0, single buffered']
    %8 = vsyncpa [#allocation3], 0
    %9 = vsyncpa [#allocation4], 0
    // Predicated region
    $region2: #{tpu_custom_call.1} parent=1 // pred_check
      _
    $region3: #{tpu_custom_call.1} parent=1 // pred_check_branch
      %11 = sbr.rel (0) target = $region5
    $region4: #{tpu_custom_call.1} parent=1 // pred_region
      %s13 = ssub.s32 256, 256
      %14 = vsyncadd [#allocation3], %s13
      %s15 = sshll.u32 [#allocation2], 4
      %s16 = int_to_ptr.vmem [resolvable:$true] %s15
      %21 = dma.hbm_to_vmem [thread:$0]  %s0, 256, %s16, [#allocation3], 128, 128, 8
    $region5: #{tpu_custom_call.1} parent=1 // pred_fallthru
      _
    // Predicated region
    $region6: #{tpu_custom_call.1} parent=1 // pred_check
      _
    $region7: #{tpu_custom_call.1} parent=1 // pred_check_branch
      %23 = sbr.rel (0) target = $region9
    $region8: #{tpu_custom_call.1} parent=1 // pred_region
      _
    $region9: #{tpu_custom_call.1} parent=1 // pred_fallthru
      _
    // Predicated region
    $region10: #{tpu_custom_call.1} parent=1 // pred_check
      _
    $region11: #{tpu_custom_call.1} parent=1 // pred_check_branch
      %25 = sbr.rel (0) target = $region13
    $region12: #{tpu_custom_call.1} parent=1 // pred_region
      _
    $region13: #{tpu_custom_call.1} parent=1 // pred_fallthru
      _
    // Predicated region
    $region14: #{tpu_custom_call.1} parent=1 // pred_check
      _
    $region15: #{tpu_custom_call.1} parent=1 // pred_check_branch
      %27 = sbr.rel (0) target = $region17
    $region16: #{tpu_custom_call.1} parent=1 // pred_region
      %28 = dma.done [#allocation3], 256
    $region17: #{tpu_custom_call.1} parent=1 // pred_fallthru
      _
    %v29 = vld [vmem:[%s1] sm:$0xff]
    %v30 = vld [vmem:[#allocation2] sm:$0xff]
    %v31 = vld [vmem:[#allocation2 + $0x8] sm:$0xff]
    %v32 = vld [vmem:[%s2] sm:$0xff]
    %34 = vset.pattern.permute.xlu0 0
    %35 = vperm.xlu0 %34, %v32
    %v36 = vpop.permute.xlu0 %35
    %vm38 = vcmask 261120
    %v40 = vsel %vm38, %v29, 0
    %v43 = vsel %vm38, %v30, 0
    %v46 = vsel %vm38, %v31, 0
    %48 = vmatprep.subr.mxu0 0.0
    %49 = vmatpush1.xpose.msra.mxu0 %v43
    %50 = vmatprep.subr.mxu0 0.0
    %51 = vmatpush1.xpose.msra.mxu0 %v46
    %52 = vmatprep.subr.mxu0 0.0
    %53 = vmatpush1.xpose.msra.mxu0 0.0
    %54 = vmatprep.subr.mxu0 0.0
    %55 = vmatpush1.xpose.msra.mxu0 0.0
    %56 = vmatprep.subr.mxu0 0.0
    %57 = vmatpush1.xpose.msra.mxu0 0.0
    %58 = vmatprep.subr.mxu0 0.0
    %59 = vmatpush1.xpose.msra.mxu0 0.0
    %60 = vmatprep.subr.mxu0 0.0
    %61 = vmatpush1.xpose.msra.mxu0 0.0
    %62 = vmatprep.subr.mxu0 0.0
    %63 = vmatpush1.xpose.msra.mxu0 0.0
    %64 = vmatprep.subr.mxu0 0.0
    %65 = vmatpush1.xpose.msra.mxu0 0.0
    %66 = vmatprep.subr.mxu0 0.0
    %67 = vmatpush1.xpose.msra.mxu0 0.0
    %68 = vmatprep.subr.mxu0 0.0
    %69 = vmatpush1.xpose.msra.mxu0 0.0
    %70 = vmatprep.subr.mxu0 0.0
    %71 = vmatpush1.xpose.msra.mxu0 0.0
    %72 = vmatprep.subr.mxu0 0.0
    %73 = vmatpush1.xpose.msra.mxu0 0.0
    %74 = vmatprep.subr.mxu0 0.0
    %75 = vmatpush1.xpose.msra.mxu0 0.0
    %76 = vmatprep.subr.mxu0 0.0
    %77 = vmatpush1.xpose.msra.mxu0 0.0
    %78 = vmatprep.subr.mxu0 0.0
    %79 = vmatpush1.xpose.msra.mxu0 0.0
    %80 = vmatprep.subr.mxu0 0.0
    %81 = vmatpush1.xpose.msra.mxu0 0.0
    %82 = vmatprep.subr.mxu0 0.0
    %83 = vmatpush1.xpose.msra.mxu0 0.0
    %84 = vmatprep.subr.mxu0 0.0
    %85 = vmatpush1.xpose.msra.mxu0 0.0
    %86 = vmatprep.subr.mxu0 0.0
    %87 = vmatpush1.xpose.msra.mxu0 0.0
    %88 = vmatprep.subr.mxu0 0.0
    %89 = vmatpush1.xpose.msra.mxu0 0.0
    %90 = vmatprep.subr.mxu0 0.0
    %91 = vmatpush1.xpose.msra.mxu0 0.0
    %92 = vmatprep.subr.mxu0 0.0
    %93 = vmatpush1.xpose.msra.mxu0 0.0
    %94 = vmatprep.subr.mxu0 0.0
    %95 = vmatpush1.xpose.msra.mxu0 0.0
    %96 = vmatprep.subr.mxu0 0.0
    %97 = vmatpush1.xpose.msra.mxu0 0.0
    %98 = vmatprep.subr.mxu0 0.0
    %99 = vmatpush1.xpose.msra.mxu0 0.0
    %100 = vmatprep.subr.mxu0 0.0
    %101 = vmatpush1.xpose.msra.mxu0 0.0
    %102 = vmatprep.subr.mxu0 0.0
    %103 = vmatpush1.xpose.msra.mxu0 0.0
    %104 = vmatprep.subr.mxu0 0.0
    %105 = vmatpush1.xpose.msra.mxu0 0.0
    %106 = vmatprep.subr.mxu0 0.0
    %107 = vmatpush1.xpose.msra.mxu0 0.0
    %108 = vmatprep.subr.mxu0 0.0
    %109 = vmatpush1.xpose.msra.mxu0 0.0
    %110 = vmatprep.subr.mxu0 0.0
    %111 = vmatpush1.xpose.msra.mxu0 0.0
    %112 = vmatprep.mubr.f32.mxu0 0.0
    %113 = vmatmul.mubr.f32.gmra.mrb[0].mxu0 %v40
    %v114 = vpop.f32.mrb[0].mxu0
    %v115 = vadd.f32 %v36, %v114
    %v116 = vpop.f32.mrb[0].mxu0
    %117 = vdwg.mxu0
    %vm118 = vcmask 130048
    %119 = vst.msk [vmem:[#allocation5] sm:$0xff] %vm118, %v115
    // Predicated region
    $region18: #{tpu_custom_call.1} parent=1 // pred_check
      _
    $region19: #{tpu_custom_call.1} parent=1 // pred_check_branch
      %121 = sbr.rel (0) target = $region21
    $region20: #{tpu_custom_call.1} parent=1 // pred_region
      %s123 = ssub.s32 128, 128
      %124 = vsyncadd [#allocation4], %s123
      %s126 = sshll.u32 [#allocation5], 4
      %s127 = int_to_ptr.vmem [resolvable:$true] %s126
      %129 = dma.vmem_to_hbm [thread:$0]  %s127, 128, %s3, [#allocation4]
    $region21: #{tpu_custom_call.1} parent=1 // pred_fallthru
      _
    // Predicated region
    $region22: #{tpu_custom_call.1} parent=1 // pred_check
      _
    $region23: #{tpu_custom_call.1} parent=1 // pred_check_branch
      %131 = sbr.rel (0) target = $region25
    $region24: #{tpu_custom_call.1} parent=1 // pred_region
      %132 = dma.done [#allocation4], 128
    $region25: #{tpu_custom_call.1} parent=1 // pred_fallthru
      _
    %133 = vsyncpa [#allocation3], 1
    %134 = vsyncpa [#allocation4], 1

</llo_original>
